<compile_context>
chip_gen: v7x
topology: tpu7x:2x2x1
jax: 0.10.0
libtpu: 0.0.40
codegen_flags: <defaults>
</compile_context>

<pallas_src>
import math

import jax
import jax.numpy as jnp
from jax.experimental import pallas as pl
from jax.experimental.pallas import tpu as pltpu


def _linear_kernel(x_ref, wt_ref, b_ref, o_ref, acc_ref):
    """One (tm, tn) output tile; grid axis 2 iterates over K blocks."""
    k = pl.program_id(2)

    @pl.when(k == 0)
    def _():
        acc_ref[...] = jnp.zeros_like(acc_ref)

    acc_ref[...] += jnp.dot(
        x_ref[...], wt_ref[...], preferred_element_type=jnp.float32
    )

    @pl.when(k == pl.num_programs(2) - 1)
    def _():
        # bias is (1, tn) and broadcasts over the tm rows of the accumulator.
        o_ref[...] = (acc_ref[...] + b_ref[...].astype(jnp.float32)).astype(
            o_ref.dtype
        )


def _round_up(v: int, m: int) -> int:
    return ((v + m - 1) // m) * m


def linear_layer(
    x: jax.Array,
    weight: jax.Array,   # (out_dim, in_dim)  -- PyTorch nn.Linear layout
    bias: jax.Array,     # (out_dim,)
    *,
    tm: int = 512,
    tn: int = 512,
    tk: int = 512,
) -> jax.Array:
    """y = x @ weight.T + bias, computed with a tiled Pallas MXU kernel."""
    orig_shape = x.shape
    in_dim = orig_shape[-1]
    out_dim = weight.shape[0]

    x2 = x.reshape(-1, in_dim)
    M, K = x2.shape
    N = out_dim

    wt = weight.T  # (K, N)
    b2 = bias.reshape(1, N)

    # Tile sizes: last dims must be multiples of 128 (lane), second-to-last
    # multiples of 8 (sublane), unless they span the full (padded) array.
    tm_ = min(tm, _round_up(M, 8))
    tk_ = min(tk, _round_up(K, 128))
    tn_ = min(tn, _round_up(N, 128))

    Mp, Kp, Np = _round_up(M, tm_), _round_up(K, tk_), _round_up(N, tn_)

    # Pad only when needed (zero-pad along K is mathematically a no-op).
    if (Mp, Kp) != (M, K):
        x2 = jnp.pad(x2, ((0, Mp - M), (0, Kp - K)))
    if (Kp, Np) != (K, N):
        wt = jnp.pad(wt, ((0, Kp - K), (0, Np - N)))
    if Np != N:
        b2 = jnp.pad(b2, ((0, 0), (0, Np - N)))

    grid = (Mp // tm_, Np // tn_, Kp // tk_)

    out = pl.pallas_call(
        _linear_kernel,
        out_shape=jax.ShapeDtypeStruct((Mp, Np), x.dtype),
        grid_spec=pltpu.PrefetchScalarGridSpec(
            num_scalar_prefetch=0,
            grid=grid,
            in_specs=[
                pl.BlockSpec((tm_, tk_), lambda i, j, k: (i, k)),   # x tile
                pl.BlockSpec((tk_, tn_), lambda i, j, k: (k, j)),   # W.T tile
                pl.BlockSpec((1, tn_), lambda i, j, k: (0, j)),     # bias tile
            ],
            out_specs=pl.BlockSpec((tm_, tn_), lambda i, j, k: (i, j)),
            scratch_shapes=[pltpu.VMEM((tm_, tn_), jnp.float32)],
        ),
        compiler_params=pltpu.CompilerParams(
            dimension_semantics=("parallel", "parallel", "arbitrary"),
        ),
    )(x2, wt, b2)

    if (Mp, Np) != (M, N):
        out = out[:M, :N]
    return out.reshape(*orig_shape[:-1], out_dim)


def init_linear_layer_params(
    key: jax.Array,
    in_dim: int,
    out_dim: int,
    omega_0: float,
    is_first: bool = False,
    dtype=jnp.float32,
):
    """Replicates LinearLayer._init_weights (SIREN init) host-side."""
    wkey, bkey = jax.random.split(key)
    if is_first:
        bound_w = 1.0 / in_dim
    else:
        bound_w = math.sqrt(6.0 / in_dim) / omega_0
    weight = jax.random.uniform(
        wkey, (out_dim, in_dim), dtype=dtype, minval=-bound_w, maxval=bound_w
    )
    # Bias keeps PyTorch nn.Linear's default init: U(-1/sqrt(in_dim), 1/sqrt(in_dim)).
    bound_b = 1.0 / math.sqrt(in_dim)
    bias = jax.random.uniform(
        bkey, (out_dim,), dtype=dtype, minval=-bound_b, maxval=bound_b
    )
    return weight, bias


if __name__ == "__main__":
    key = jax.random.PRNGKey(0)
    xkey, pkey = jax.random.split(key)

    # Small SIREN-like shapes: batch=2, 8 coordinate points, hidden=32.
    in_dim, out_dim, omega_0 = 32, 32, 30.0
    x = jax.random.normal(xkey, (2, 8, in_dim), dtype=jnp.float32)
    weight, bias = init_linear_layer_params(
        pkey, in_dim, out_dim, omega_0, is_first=False
    )

    y = linear_layer(x, weight, bias)
    y = jax.block_until_ready(y)

    # Reference (high-precision) check.
    y_ref = (
        jnp.einsum(
            "bsi,oi->bso", x, weight, precision=jax.lax.Precision.HIGHEST
        )
        + bias
    )
    assert y.shape == (2, 8, out_dim) and y.dtype == x.dtype
    assert float(jnp.max(jnp.abs(y - y_ref))) < 2e-3

    print("KERNEL_OK")
</pallas_src>

<mosaic_0001>
module attributes {stable_mosaic.version = 11 : i64} {
  func.func @_linear_kernel(%arg0: i32, %arg1: i32, %arg2: i32, %arg3: memref<16x128xf32, #tpu.memory_space<vmem>>, %arg4: memref<128x128xf32, #tpu.memory_space<vmem>>, %arg5: memref<1x128xf32, #tpu.memory_space<vmem>>, %arg6: memref<16x128xf32, #tpu.memory_space<vmem>>, %arg7: memref<16x128xf32, #tpu.memory_space<vmem>>) attributes {dimension_semantics = [#tpu.dimension_semantics<parallel>, #tpu.dimension_semantics<parallel>, #tpu.dimension_semantics<arbitrary>], iteration_bounds = array<i64: 1, 1, 1>, scalar_prefetch = 0 : i64, scratch_operands = 1 : i64, tpu.core_type = #tpu.core_type<tc>, window_params = [{transform_indices = @transform_0, window_bounds = array<i64: 16, 128>}, {transform_indices = @transform_1, window_bounds = array<i64: 128, 128>}, {transform_indices = @transform_2, window_bounds = array<i64: 1, 128>}, {transform_indices = @transform_3, window_bounds = array<i64: 16, 128>}]} {
    %c0_i32 = arith.constant 0 : i32
    %0 = arith.cmpi eq, %arg2, %c0_i32 : i32
    %1 = arith.extui %0 : i1 to i32
    %c0_i32_0 = arith.constant 0 : i32
    %2 = arith.cmpi ne, %1, %c0_i32_0 : i32
    scf.if %2 {
      %cst_10 = arith.constant 0.000000e+00 : f32
      %12 = vector.broadcast %cst_10 : f32 to vector<16x128xf32>
      %c0_11 = arith.constant 0 : index
      %c0_12 = arith.constant 0 : index
      %13 = vector.load %arg7[%c0_11, %c0_12] : memref<16x128xf32, #tpu.memory_space<vmem>>, vector<16x128xf32>
      tpu.vector_store %arg7[%c0_11, %c0_12], %12 {strides = array<i32>} : memref<16x128xf32, #tpu.memory_space<vmem>>, vector<16x128xf32>,
    } else {
    }
    %c0 = arith.constant 0 : index
    %c0_1 = arith.constant 0 : index
    %3 = vector.load %arg7[%c0, %c0_1] : memref<16x128xf32, #tpu.memory_space<vmem>>, vector<16x128xf32>
    %c0_2 = arith.constant 0 : index
    %c0_3 = arith.constant 0 : index
    %4 = vector.load %arg3[%c0_2, %c0_3] : memref<16x128xf32, #tpu.memory_space<vmem>>, vector<16x128xf32>
    %c0_4 = arith.constant 0 : index
    %c0_5 = arith.constant 0 : index
    %5 = vector.load %arg4[%c0_4, %c0_5] : memref<128x128xf32, #tpu.memory_space<vmem>>, vector<128x128xf32>
    %cst = arith.constant dense<0.000000e+00> : vector<16x128xf32>
    %6 = tpu.matmul %4, %5, %cst {dimension_numbers = #tpu.dot_dimension_numbers<[1], [0], [0], [1], [0, 0, 1, 1], [], []>} : vector<16x128xf32>, vector<128x128xf32>, vector<16x128xf32> -> vector<16x128xf32>
    %7 = arith.addf %3, %6 : vector<16x128xf32>
    %c0_6 = arith.constant 0 : index
    %c0_7 = arith.constant 0 : index
    %8 = vector.load %arg7[%c0_6, %c0_7] : memref<16x128xf32, #tpu.memory_space<vmem>>, vector<16x128xf32>
    tpu.vector_store %arg7[%c0_6, %c0_7], %7 {strides = array<i32>} : memref<16x128xf32, #tpu.memory_space<vmem>>, vector<16x128xf32>,
    %c0_i32_8 = arith.constant 0 : i32
    %9 = arith.cmpi eq, %arg2, %c0_i32_8 : i32
    %10 = arith.extui %9 : i1 to i32
    %c0_i32_9 = arith.constant 0 : i32
    %11 = arith.cmpi ne, %10, %c0_i32_9 : i32
    scf.if %11 {
      %c0_10 = arith.constant 0 : index
      %c0_11 = arith.constant 0 : index
      %12 = vector.load %arg7[%c0_10, %c0_11] : memref<16x128xf32, #tpu.memory_space<vmem>>, vector<16x128xf32>
      %c0_12 = arith.constant 0 : index
      %c0_13 = arith.constant 0 : index
      %13 = vector.load %arg5[%c0_12, %c0_13] : memref<1x128xf32, #tpu.memory_space<vmem>>, vector<1x128xf32>
      %14 = vector.broadcast %13 : vector<1x128xf32> to vector<16x128xf32>
      %15 = arith.addf %12, %14 : vector<16x128xf32>
      %c0_14 = arith.constant 0 : index
      %c0_15 = arith.constant 0 : index
      %16 = vector.load %arg6[%c0_14, %c0_15] : memref<16x128xf32, #tpu.memory_space<vmem>>, vector<16x128xf32>
      tpu.vector_store %arg6[%c0_14, %c0_15], %15 {strides = array<i32>} : memref<16x128xf32, #tpu.memory_space<vmem>>, vector<16x128xf32>,
    } else {
    }
    return
  }
  func.func @transform_0(%arg0: i32, %arg1: i32, %arg2: i32) -> (i32, i32) {
    %c0_i32 = arith.constant 0 : i32
    return %arg0, %arg2 : i32, i32
  }
  func.func @transform_1(%arg0: i32, %arg1: i32, %arg2: i32) -> (i32, i32) {
    %c0_i32 = arith.constant 0 : i32
    return %arg2, %arg1 : i32, i32
  }
  func.func @transform_2(%arg0: i32, %arg1: i32, %arg2: i32) -> (i32, i32) {
    %c0_i32 = arith.constant 0 : i32
    %c0_i32_0 = arith.constant 0 : i32
    return %c0_i32, %arg1 : i32, i32
  }
  func.func @transform_3(%arg0: i32, %arg1: i32, %arg2: i32) -> (i32, i32) {
    %c0_i32 = arith.constant 0 : i32
    return %arg0, %arg1 : i32, i32
  }
}

</mosaic_0001>

<llo_original>
// kernel: tpu_custom_call.1
$region0: #{tpu_custom_call.1}
  #allocation0 [shape = 'u32[]', space=smem, size = 0x4, offset = 0x4, fixed_abs, tag = 'smem constant byte address 0x4 - core index']
  #allocation1 [shape = 'u32[144,128]{1,0:T(1,128)}', space=vmem, size = 0x12000, scoped, tag = 'internal scratch']
  #allocation2 [shape = 'f32[16,128]{1,0:T(8,128)}', space=vmem, size = 0x2000, scoped, tag = 'scratch operand']
  %s0 = inlined_call_operand.hbm [shape: f32[16,128], index: 0, kind: input, shape index: {}]
  %s1 = inlined_call_operand.hbm [shape: f32[128,128], index: 1, kind: input, shape index: {}]
  %s2 = inlined_call_operand.vmem [shape: f32[1,128], index: 2, kind: input, shape index: {}]
  %s3 = inlined_call_operand.hbm [shape: f32[16,128], index: 3, kind: output, shape index: {}]
  %s4 = sld [smem:[#allocation0]]
  $region38: #{tpu_custom_call.1} parent=0
    _
  %s6 = ssub.s32 1, %s4
  %s7 = scalar_select 0, %s6, %s4
  $region1: #{tpu_custom_call.1} parent=0
    #allocation3 [shape = 'u8[8192]{0}', space=vmem, size = 0x2000, scoped, tag = 'input window, operand 0, single buffered']
    #allocation4 [shape = 's32[1]{0}', space=sflag, size = 0x4, scoped, tag = 'scoped memory for tpu_custom_call.1']
    #allocation5 [shape = 's32[1]{0}', space=sflag, size = 0x4, scoped, tag = 'scoped memory for tpu_custom_call.1']
    #allocation6 [shape = 'u8[65536]{0}', space=vmem, size = 0x10000, scoped, tag = 'input window, operand 1, single buffered']
    #allocation7 [shape = 's32[1]{0}', space=sflag, size = 0x4, scoped, tag = 'scoped memory for tpu_custom_call.1']
    #allocation8 [shape = 'u8[8192]{0}', space=vmem, size = 0x2000, scoped, tag = 'output window, operand 0, single buffered']
    %8 = vsyncpa [#allocation4], 0
    %9 = vsyncpa [#allocation7], 0
    %10 = vsyncpa [#allocation5], 0
    // Predicated region
    $region2: #{tpu_custom_call.1} parent=1 // pred_check
      _
    $region3: #{tpu_custom_call.1} parent=1 // pred_check_branch
      %12 = sbr.rel (0) target = $region5
    $region4: #{tpu_custom_call.1} parent=1 // pred_region
      %s14 = ssub.s32 256, 256
      %15 = vsyncadd [#allocation4], %s14
      %s16 = sshll.u32 [#allocation3], 4
      %s17 = int_to_ptr.vmem [resolvable:$true] %s16
      %22 = dma.hbm_to_vmem [thread:$0]  %s0, 256, %s17, [#allocation4], 128, 128, 8
    $region5: #{tpu_custom_call.1} parent=1 // pred_fallthru
      _
    // Predicated region
    $region6: #{tpu_custom_call.1} parent=1 // pred_check
      _
    $region7: #{tpu_custom_call.1} parent=1 // pred_check_branch
      %24 = sbr.rel (0) target = $region9
    $region8: #{tpu_custom_call.1} parent=1 // pred_region
      %s26 = ssub.s32 2048, 2048
      %27 = vsyncadd [#allocation7], %s26
      %s28 = sshll.u32 [#allocation6], 4
      %s29 = int_to_ptr.vmem [resolvable:$true] %s28
      %34 = dma.hbm_to_vmem [thread:$0]  %s1, 2048, %s29, [#allocation7], 128, 128, 8
    $region9: #{tpu_custom_call.1} parent=1 // pred_fallthru
      _
    // Predicated region
    $region10: #{tpu_custom_call.1} parent=1 // pred_check
      _
    $region11: #{tpu_custom_call.1} parent=1 // pred_check_branch
      %36 = sbr.rel (0) target = $region13
    $region12: #{tpu_custom_call.1} parent=1 // pred_region
      _
    $region13: #{tpu_custom_call.1} parent=1 // pred_fallthru
      _
    // Predicated region
    $region14: #{tpu_custom_call.1} parent=1 // pred_check
      _
    $region15: #{tpu_custom_call.1} parent=1 // pred_check_branch
      %38 = sbr.rel (0) target = $region17
    $region16: #{tpu_custom_call.1} parent=1 // pred_region
      %39 = dma.done [#allocation4], 256
    $region17: #{tpu_custom_call.1} parent=1 // pred_fallthru
      _
    // Predicated region
    $region18: #{tpu_custom_call.1} parent=1 // pred_check
      _
    $region19: #{tpu_custom_call.1} parent=1 // pred_check_branch
      %41 = sbr.rel (0) target = $region21
    $region20: #{tpu_custom_call.1} parent=1 // pred_region
      %42 = dma.done [#allocation7], 2048
    $region21: #{tpu_custom_call.1} parent=1 // pred_fallthru
      _
    %p43 = scmp.eq.s32.totalorder 0, 0
    // Predicated region
    $region22: #{tpu_custom_call.1} parent=1 // pred_check
      %p44 = pneg %p43
    $region23: #{tpu_custom_call.1} parent=1 // pred_check_branch
      %46 = sbr.rel (%p44) target = $region25
    $region24: #{tpu_custom_call.1} parent=1 // pred_region
      %47 = vst [vmem:[#allocation2] sm:$0xff] 0.0
      %48 = vst [vmem:[#allocation2 + $0x8] sm:$0xff] 0.0
    $region25: #{tpu_custom_call.1} parent=1 // pred_fallthru
      _
    %v49 = vld [vmem:[#allocation2] sm:$0xff]
    %v50 = vld [vmem:[#allocation2 + $0x8] sm:$0xff]
    %v51 = vld [vmem:[#allocation3] sm:$0xff]
    %v52 = vld [vmem:[#allocation3 + $0x8] sm:$0xff]
    %v53 = vld [vmem:[#allocation6] sm:$0xff]
    %v54 = vld [vmem:[#allocation6 + $0x8] sm:$0xff]
    %v55 = vld [vmem:[#allocation6 + $0x10] sm:$0xff]
    %v56 = vld [vmem:[#allocation6 + $0x18] sm:$0xff]
    %v57 = vld [vmem:[#allocation6 + $0x20] sm:$0xff]
    %v58 = vld [vmem:[#allocation6 + $0x28] sm:$0xff]
    %v59 = vld [vmem:[#allocation6 + $0x30] sm:$0xff]
    %v60 = vld [vmem:[#allocation6 + $0x38] sm:$0xff]
    %v61 = vld [vmem:[#allocation6 + $0x40] sm:$0xff]
    %v62 = vld [vmem:[#allocation6 + $0x48] sm:$0xff]
    %v63 = vld [vmem:[#allocation6 + $0x50] sm:$0xff]
    %v64 = vld [vmem:[#allocation6 + $0x58] sm:$0xff]
    %v65 = vld [vmem:[#allocation6 + $0x60] sm:$0xff]
    %v66 = vld [vmem:[#allocation6 + $0x68] sm:$0xff]
    %v67 = vld [vmem:[#allocation6 + $0x70] sm:$0xff]
    %v68 = vld [vmem:[#allocation6 + $0x78] sm:$0xff]
    %69 = vmatprep.subr.mxu0 0.0
    %70 = vmatpush1.msra.mxu0 %v53
    %71 = vmatprep.subr.mxu0 0.0
    %72 = vmatpush1.msra.mxu0 %v54
    %73 = vmatprep.subr.mxu0 0.0
    %74 = vmatpush1.msra.mxu0 %v55
    %75 = vmatprep.subr.mxu0 0.0
    %76 = vmatpush1.msra.mxu0 %v56
    %77 = vmatprep.subr.mxu0 0.0
    %78 = vmatpush1.msra.mxu0 %v57
    %79 = vmatprep.subr.mxu0 0.0
    %80 = vmatpush1.msra.mxu0 %v58
    %81 = vmatprep.subr.mxu0 0.0
    %82 = vmatpush1.msra.mxu0 %v59
    %83 = vmatprep.subr.mxu0 0.0
    %84 = vmatpush1.msra.mxu0 %v60
    %85 = vmatprep.subr.mxu0 0.0
    %86 = vmatpush1.msra.mxu0 %v61
    %87 = vmatprep.subr.mxu0 0.0
    %88 = vmatpush1.msra.mxu0 %v62
    %89 = vmatprep.subr.mxu0 0.0
    %90 = vmatpush1.msra.mxu0 %v63
    %91 = vmatprep.subr.mxu0 0.0
    %92 = vmatpush1.msra.mxu0 %v64
    %93 = vmatprep.subr.mxu0 0.0
    %94 = vmatpush1.msra.mxu0 %v65
    %95 = vmatprep.subr.mxu0 0.0
    %96 = vmatpush1.msra.mxu0 %v66
    %97 = vmatprep.subr.mxu0 0.0
    %98 = vmatpush1.msra.mxu0 %v67
    %99 = vmatprep.subr.mxu0 0.0
    %100 = vmatpush1.msra.mxu0 %v68
    %101 = vmatprep.subr.mxu0 0.0
    %102 = vmatpush1.msra.mxu0 0.0
    %103 = vmatprep.subr.mxu0 0.0
    %104 = vmatpush1.msra.mxu0 0.0
    %105 = vmatprep.subr.mxu0 0.0
    %106 = vmatpush1.msra.mxu0 0.0
    %107 = vmatprep.subr.mxu0 0.0
    %108 = vmatpush1.msra.mxu0 0.0
    %109 = vmatprep.subr.mxu0 0.0
    %110 = vmatpush1.msra.mxu0 0.0
    %111 = vmatprep.subr.mxu0 0.0
    %112 = vmatpush1.msra.mxu0 0.0
    %113 = vmatprep.subr.mxu0 0.0
    %114 = vmatpush1.msra.mxu0 0.0
    %115 = vmatprep.subr.mxu0 0.0
    %116 = vmatpush1.msra.mxu0 0.0
    %117 = vmatprep.subr.mxu0 0.0
    %118 = vmatpush1.msra.mxu0 0.0
    %119 = vmatprep.subr.mxu0 0.0
    %120 = vmatpush1.msra.mxu0 0.0
    %121 = vmatprep.subr.mxu0 0.0
    %122 = vmatpush1.msra.mxu0 0.0
    %123 = vmatprep.subr.mxu0 0.0
    %124 = vmatpush1.msra.mxu0 0.0
    %125 = vmatprep.subr.mxu0 0.0
    %126 = vmatpush1.msra.mxu0 0.0
    %127 = vmatprep.subr.mxu0 0.0
    %128 = vmatpush1.msra.mxu0 0.0
    %129 = vmatprep.subr.mxu0 0.0
    %130 = vmatpush1.msra.mxu0 0.0
    %131 = vmatprep.subr.mxu0 0.0
    %132 = vmatpush1.msra.mxu0 0.0
    %133 = vmatprep.mubr.f32.mxu0 0.0
    %134 = vmatmul.mubr.f32.gmra.mrb[0].mxu0 %v51
    %v135 = vpop.f32.mrb[0].mxu0
    %v136 = vadd.f32 0.0, %v135
    %v137 = vpop.f32.mrb[0].mxu0
    %138 = vmatprep.mubr.f32.mxu0 0.0
    %139 = vmatmul.mubr.f32.gmra.mrb[0].mxu0 %v52
    %v140 = vpop.f32.mrb[0].mxu0
    %v141 = vadd.f32 0.0, %v140
    %v142 = vpop.f32.mrb[0].mxu0
    %143 = vdwg.mxu0
    %v144 = vadd.f32 %v49, %v136
    %v145 = vadd.f32 %v50, %v141
    %146 = vst [vmem:[#allocation2] sm:$0xff] %v144
    %147 = vst [vmem:[#allocation2 + $0x8] sm:$0xff] %v145
    // Predicated region
    $region26: #{tpu_custom_call.1} parent=1 // pred_check
      %p148 = pneg %p43
    $region27: #{tpu_custom_call.1} parent=1 // pred_check_branch
      %150 = sbr.rel (%p148) target = $region29
    $region28: #{tpu_custom_call.1} parent=1 // pred_region
      %v151 = vld [vmem:[#allocation2] sm:$0xff]
      %v152 = vld [vmem:[#allocation2 + $0x8] sm:$0xff]
      %v153 = vld [vmem:[%s2] sm:$0x1]
      %v155 = vlaneseq
      %v156 = vshrl.u32 %v155, 7
      %v157 = vsub.s32 0, %v156
      %v158 = vrot.slane %v153, %v157
      %v160 = vadd.f32 %v151, %v158
      %v161 = vadd.f32 %v152, %v158
      %162 = vst [vmem:[#allocation8] sm:$0xff] %v160
      %163 = vst [vmem:[#allocation8 + $0x8] sm:$0xff] %v161
    $region29: #{tpu_custom_call.1} parent=1 // pred_fallthru
      _
    // Predicated region
    $region30: #{tpu_custom_call.1} parent=1 // pred_check
      _
    $region31: #{tpu_custom_call.1} parent=1 // pred_check_branch
      %165 = sbr.rel (0) target = $region33
    $region32: #{tpu_custom_call.1} parent=1 // pred_region
      %s167 = ssub.s32 256, 256
      %168 = vsyncadd [#allocation5], %s167
      %s169 = sshll.u32 [#allocation8], 4
      %s170 = int_to_ptr.vmem [resolvable:$true] %s169
      %175 = dma.vmem_to_hbm [thread:$0]  %s170, 256, %s3, [#allocation5], 128, 128, 8
    $region33: #{tpu_custom_call.1} parent=1 // pred_fallthru
      _
    // Predicated region
    $region34: #{tpu_custom_call.1} parent=1 // pred_check
      _
    $region35: #{tpu_custom_call.1} parent=1 // pred_check_branch
      %177 = sbr.rel (0) target = $region37
    $region36: #{tpu_custom_call.1} parent=1 // pred_region
      %178 = dma.done [#allocation5], 256
    $region37: #{tpu_custom_call.1} parent=1 // pred_fallthru
      _
    %179 = vsyncpa [#allocation4], 1
    %180 = vsyncpa [#allocation7], 1
    %181 = vsyncpa [#allocation5], 1

</llo_original>
